<compile_context>
chip_gen: v7x
topology: tpu7x:2x2x1
jax: 0.10.0
libtpu: 0.0.40
codegen_flags: <defaults>
</compile_context>

<pallas_src>
import functools

import jax
import jax.numpy as jnp
from jax import lax
from jax.experimental import pallas as pl
from jax.experimental.pallas import tpu as pltpu

NEG_SLOPE = 0.2
BN_EPS = 1e-5


def _leaky_relu(x):
    return jnp.where(x > 0, x, NEG_SLOPE * x)


# ------------------- fused kernel: edge MLP + k-sum + conv/BN/LReLU -------------------
def _fused_local_gcn_kernel(v0_ref, vn_ref, fn_ref, mlp_ref, sc_ref, o_ref, *, bn, k):
    # Row layout: k contiguous blocks of bn = B*N rows (block j = neighbour slot j).
    v0 = v0_ref[...]                                                  # [k*bn, 3]
    vn = vn_ref[...]                                                  # [k*bn, 3]
    diff = v0 - vn
    # TODO(synk): sqrt(0) on the self-edge is fine for forward; guard with eps if this
    # path is ever differentiated.
    nrm = jnp.sqrt(jnp.sum(diff * diff, axis=-1, keepdims=True))      # [k*bn, 1]

    mw = mlp_ref[...]                                                 # [23, 10] packed
    # Linear(10,10) split by input fragment: avoids the lane-axis concatenate of the
    # 3+3+3+1-wide feature (cat((v0, v, v0-v, ||v0-v||), -1) in the reference).
    h = (jnp.dot(v0, mw[0:3, :], preferred_element_type=jnp.float32)
         + jnp.dot(vn, mw[3:6, :], preferred_element_type=jnp.float32)
         + jnp.dot(diff, mw[6:9, :], preferred_element_type=jnp.float32)
         + nrm * mw[9:10, :]                                          # VPU outer product
         + mw[20:21, :])                                              # b1
    h = _leaky_relu(h)
    h = _leaky_relu(jnp.dot(h, mw[10:20, :],
                            preferred_element_type=jnp.float32) + mw[21:22, :])
    # Linear(10,1) on the VPU (avoid a 1-lane-wide MXU output).
    wgt = jnp.sum(h * mw[22:23, :], axis=-1, keepdims=True) + sc_ref[0]   # [k*bn, 1]

    weighted = wgt * fn_ref[...]                                      # [k*bn, D]
    # Sum over the k neighbours: unrolled add of k static, sublane-aligned row blocks
    # (replaces the old [N, N*k] pooling matmul and its HBM input).
    acc = weighted[0:bn, :]
    for j in range(1, k):
        acc = acc + weighted[j * bn:(j + 1) * bn, :]                  # [bn, D]

    # Conv2d(1,1,1) + BatchNorm2d(1) (training-mode batch stats) + LeakyReLU in one
    # pass: conv scalars folded into the statistics, then a single scale/shift FMA.
    conv_w, conv_b = sc_ref[1], sc_ref[2]
    gamma, beta = sc_ref[3], sc_ref[4]
    cnt = float(acc.shape[0] * acc.shape[1])
    s = jnp.sum(acc, axis=(0, 1), keepdims=True)                      # [1, 1]
    ss = jnp.sum(acc * acc, axis=(0, 1), keepdims=True)               # [1, 1]
    mean_x = s / cnt
    var_x = jnp.maximum(ss / cnt - mean_x * mean_x, 0.0)              # biased variance
    mean_y = conv_w * mean_x + conv_b                                 # stats of w*x + b
    var_y = conv_w * conv_w * var_x
    inv = lax.rsqrt(var_y + BN_EPS)
    scale = gamma * conv_w * inv
    shift = gamma * (conv_b - mean_y) * inv + beta
    o_ref[...] = _leaky_relu(scale * acc + shift)


# ----------------------------------- forward wrapper ----------------------------------
def local_gcn_forward(F_feat, V, k, params):
    """F_feat: [B, n_views, D], V: [B, n_views, 3]  ->  [B, n_views, D]."""
    B, N, D = F_feat.shape
    bn = B * N

    # --- knn(): tiny distance matrix + top-k + gather stay in plain XLA -------------
    # TODO(synk): torch.topk(largest=False) has no clean Pallas/TPU sort; use lax.top_k.
    sq = jnp.sum(V * V, axis=-1)                                      # [B, N]
    d = sq[:, :, None] + sq[:, None, :] - 2.0 * jnp.einsum(
        "bic,bjc->bij", V, V, preferred_element_type=jnp.float32)     # symmetric [B,N,N]
    _, idx = lax.top_k(-d, k)                                         # [B, N, k]

    f_nbr = jax.vmap(lambda f, i: f[i])(F_feat, idx)                  # [B, N, k, D]
    v_nbr = jax.vmap(lambda v, i: v[i])(V, idx)                       # [B, N, k, 3]
    # TODO(synk): at real problem sizes gather F inside the kernel (scalar-prefetched
    # idx + pl.Element rows / manual DMA) to avoid the k-duplicated HBM copy.

    # Lay neighbours out as k contiguous row blocks of B*N rows (whole batch, no grid).
    vn_f = jnp.moveaxis(v_nbr, 2, 0).reshape(k * bn, 3)
    fn_f = jnp.moveaxis(f_nbr, 2, 0).reshape(k * bn, D)
    v0_f = jnp.tile(v_nbr[:, :, 0, :].reshape(bn, 3), (k, 1))         # [k*bn, 3]

    # Pack MLP params into one array: rows 0:10 w1, 10:20 w2, 20 b1, 21 b2, 22 w3^T.
    mlp_packed = jnp.concatenate(
        [params["w1"], params["w2"], params["b1"], params["b2"], params["w3"].T],
        axis=0).astype(jnp.float32)                                   # [23, 10]
    scalars = jnp.stack([params["b3"].reshape(()), params["conv_w"], params["conv_b"],
                         params["bn_gamma"], params["bn_beta"]]).astype(jnp.float32)

    kernel = functools.partial(_fused_local_gcn_kernel, bn=bn, k=k)
    out2d = pl.pallas_call(
        kernel,
        out_shape=jax.ShapeDtypeStruct((bn, D), jnp.float32),
        in_specs=[pl.BlockSpec(memory_space=pltpu.MemorySpace.VMEM)] * 4
                 + [pl.BlockSpec(memory_space=pltpu.MemorySpace.SMEM)],
        out_specs=pl.BlockSpec(memory_space=pltpu.MemorySpace.VMEM),
        # TODO(synk): for non-toy B*N*D, add a row-blocked grid (two-pass BN stats) with
        # the batch axis marked "parallel" (v7x: 2 TensorCores, 64 MiB VMEM).
    )(v0_f, vn_f, fn_f, mlp_packed, scalars)
    return out2d.reshape(B, N, D)


def init_params(key):
    ks = jax.random.split(key, 8)

    def uni(kk, shape, fan_in):
        bound = 1.0 / (fan_in ** 0.5)
        return jax.random.uniform(kk, shape, jnp.float32, -bound, bound)

    return {
        # KNN_dist.R : Linear(10,10) -> LReLU -> Linear(10,10) -> LReLU -> Linear(10,1)
        # (weights stored as [in, out]; PyTorch Linear applies x @ W.T + b)
        "w1": uni(ks[0], (10, 10), 10), "b1": uni(ks[1], (1, 10), 10),
        "w2": uni(ks[2], (10, 10), 10), "b2": uni(ks[3], (1, 10), 10),
        "w3": uni(ks[4], (10, 1), 10), "b3": uni(ks[5], (1, 1), 10),
        # Conv2d(1, 1, 1): scalar weight/bias.  BatchNorm2d(1): gamma=1, beta=0.
        "conv_w": uni(ks[6], (), 1), "conv_b": uni(ks[7], (), 1),
        "bn_gamma": jnp.float32(1.0), "bn_beta": jnp.float32(0.0),
    }


if __name__ == "__main__":
    B, n_views, D, k = 2, 8, 32, 4
    key = jax.random.PRNGKey(0)
    k_feat, k_v, k_param = jax.random.split(key, 3)
    F_feat = jax.random.normal(k_feat, (B, n_views, D), jnp.float32)
    V = jax.random.normal(k_v, (B, n_views, 3), jnp.float32)
    params = init_params(k_param)

    fwd = jax.jit(local_gcn_forward, static_argnums=2)
    out = fwd(F_feat, V, k, params)
    jax.block_until_ready(out)
    assert out.shape == (B, n_views, D) and out.dtype == jnp.float32
    assert bool(jnp.all(jnp.isfinite(out)))
    print("KERNEL_OK")
</pallas_src>

<mosaic_0001>
module attributes {stable_mosaic.version = 11 : i64} {
  func.func @_fused_local_gcn_kernel(%arg0: memref<64x3xf32, #tpu.memory_space<vmem>>, %arg1: memref<64x3xf32, #tpu.memory_space<vmem>>, %arg2: memref<64x32xf32, #tpu.memory_space<vmem>>, %arg3: memref<23x10xf32, #tpu.memory_space<vmem>>, %arg4: memref<5xf32, #tpu.memory_space<smem>>, %arg5: memref<16x32xf32, #tpu.memory_space<vmem>>) attributes {dimension_semantics = [], scalar_prefetch = 0 : i64, scratch_operands = 0 : i64, tpu.core_type = #tpu.core_type<tc>} {
    %c0 = arith.constant 0 : index
    %c0_0 = arith.constant 0 : index
    %0 = vector.load %arg0[%c0, %c0_0] : memref<64x3xf32, #tpu.memory_space<vmem>>, vector<64x3xf32>
    %c0_1 = arith.constant 0 : index
    %c0_2 = arith.constant 0 : index
    %1 = vector.load %arg1[%c0_1, %c0_2] : memref<64x3xf32, #tpu.memory_space<vmem>>, vector<64x3xf32>
    %2 = arith.subf %0, %1 : vector<64x3xf32>
    %3 = arith.mulf %2, %2 : vector<64x3xf32>
    %cst = arith.constant dense<0.000000e+00> : vector<64xf32>
    %4 = vector.multi_reduction <add>, %3, %cst [1] : vector<64x3xf32> to vector<64xf32>
    %5 = vector.shape_cast %4 : vector<64xf32> to vector<64x1xf32>
    %6 = math.sqrt %5 : vector<64x1xf32>
    %c0_3 = arith.constant 0 : index
    %c0_4 = arith.constant 0 : index
    %7 = vector.load %arg3[%c0_3, %c0_4] : memref<23x10xf32, #tpu.memory_space<vmem>>, vector<23x10xf32>
    %8 = vector.extract_strided_slice %7 {offsets = [0, 0], sizes = [3, 10], strides = [1, 1]} : vector<23x10xf32> to vector<3x10xf32>
    %cst_5 = arith.constant dense<0.000000e+00> : vector<64x10xf32>
    %9 = tpu.matmul %0, %8, %cst_5 {dimension_numbers = #tpu.dot_dimension_numbers<[1], [0], [0], [1], [0, 0, 1, 1], [], []>} : vector<64x3xf32>, vector<3x10xf32>, vector<64x10xf32> -> vector<64x10xf32>
    %10 = vector.extract_strided_slice %7 {offsets = [3, 0], sizes = [3, 10], strides = [1, 1]} : vector<23x10xf32> to vector<3x10xf32>
    %cst_6 = arith.constant dense<0.000000e+00> : vector<64x10xf32>
    %11 = tpu.matmul %1, %10, %cst_6 {dimension_numbers = #tpu.dot_dimension_numbers<[1], [0], [0], [1], [0, 0, 1, 1], [], []>} : vector<64x3xf32>, vector<3x10xf32>, vector<64x10xf32> -> vector<64x10xf32>
    %12 = arith.addf %9, %11 : vector<64x10xf32>
    %13 = vector.extract_strided_slice %7 {offsets = [6, 0], sizes = [3, 10], strides = [1, 1]} : vector<23x10xf32> to vector<3x10xf32>
    %cst_7 = arith.constant dense<0.000000e+00> : vector<64x10xf32>
    %14 = tpu.matmul %2, %13, %cst_7 {dimension_numbers = #tpu.dot_dimension_numbers<[1], [0], [0], [1], [0, 0, 1, 1], [], []>} : vector<64x3xf32>, vector<3x10xf32>, vector<64x10xf32> -> vector<64x10xf32>
    %15 = arith.addf %12, %14 : vector<64x10xf32>
    %16 = vector.extract_strided_slice %7 {offsets = [9, 0], sizes = [1, 10], strides = [1, 1]} : vector<23x10xf32> to vector<1x10xf32>
    %17 = vector.broadcast %6 : vector<64x1xf32> to vector<64x10xf32>
    %18 = vector.broadcast %16 : vector<1x10xf32> to vector<64x10xf32>
    %19 = arith.mulf %17, %18 : vector<64x10xf32>
    %20 = arith.addf %15, %19 : vector<64x10xf32>
    %21 = vector.extract_strided_slice %7 {offsets = [20, 0], sizes = [1, 10], strides = [1, 1]} : vector<23x10xf32> to vector<1x10xf32>
    %22 = vector.broadcast %21 : vector<1x10xf32> to vector<64x10xf32>
    %23 = arith.addf %20, %22 : vector<64x10xf32>
    %cst_8 = arith.constant 0.000000e+00 : f32
    %24 = vector.broadcast %cst_8 : f32 to vector<64x10xf32>
    %25 = arith.cmpf ogt, %23, %24 : vector<64x10xf32>
    %cst_9 = arith.constant 2.000000e-01 : f32
    %26 = vector.broadcast %cst_9 : f32 to vector<64x10xf32>
    %27 = arith.mulf %26, %23 : vector<64x10xf32>
    %28 = arith.select %25, %23, %27 : vector<64x10xi1>, vector<64x10xf32>
    %29 = vector.extract_strided_slice %7 {offsets = [10, 0], sizes = [10, 10], strides = [1, 1]} : vector<23x10xf32> to vector<10x10xf32>
    %cst_10 = arith.constant dense<0.000000e+00> : vector<64x10xf32>
    %30 = tpu.matmul %28, %29, %cst_10 {dimension_numbers = #tpu.dot_dimension_numbers<[1], [0], [0], [1], [0, 0, 1, 1], [], []>} : vector<64x10xf32>, vector<10x10xf32>, vector<64x10xf32> -> vector<64x10xf32>
    %31 = vector.extract_strided_slice %7 {offsets = [21, 0], sizes = [1, 10], strides = [1, 1]} : vector<23x10xf32> to vector<1x10xf32>
    %32 = vector.broadcast %31 : vector<1x10xf32> to vector<64x10xf32>
    %33 = arith.addf %30, %32 : vector<64x10xf32>
    %cst_11 = arith.constant 0.000000e+00 : f32
    %34 = vector.broadcast %cst_11 : f32 to vector<64x10xf32>
    %35 = arith.cmpf ogt, %33, %34 : vector<64x10xf32>
    %cst_12 = arith.constant 2.000000e-01 : f32
    %36 = vector.broadcast %cst_12 : f32 to vector<64x10xf32>
    %37 = arith.mulf %36, %33 : vector<64x10xf32>
    %38 = arith.select %35, %33, %37 : vector<64x10xi1>, vector<64x10xf32>
    %39 = vector.extract_strided_slice %7 {offsets = [22, 0], sizes = [1, 10], strides = [1, 1]} : vector<23x10xf32> to vector<1x10xf32>
    %40 = vector.broadcast %39 : vector<1x10xf32> to vector<64x10xf32>
    %41 = arith.mulf %38, %40 : vector<64x10xf32>
    %cst_13 = arith.constant dense<0.000000e+00> : vector<64xf32>
    %42 = vector.multi_reduction <add>, %41, %cst_13 [1] : vector<64x10xf32> to vector<64xf32>
    %43 = vector.shape_cast %42 : vector<64xf32> to vector<64x1xf32>
    %c0_14 = arith.constant 0 : index
    %44 = memref.load %arg4[%c0_14] : memref<5xf32, #tpu.memory_space<smem>>
    %45 = vector.broadcast %44 : f32 to vector<64x1xf32>
    %46 = arith.addf %43, %45 : vector<64x1xf32>
    %c0_15 = arith.constant 0 : index
    %c0_16 = arith.constant 0 : index
    %47 = vector.load %arg2[%c0_15, %c0_16] : memref<64x32xf32, #tpu.memory_space<vmem>>, vector<64x32xf32>
    %48 = vector.broadcast %46 : vector<64x1xf32> to vector<64x32xf32>
    %49 = arith.mulf %48, %47 : vector<64x32xf32>
    %50 = vector.extract_strided_slice %49 {offsets = [0, 0], sizes = [16, 32], strides = [1, 1]} : vector<64x32xf32> to vector<16x32xf32>
    %51 = vector.extract_strided_slice %49 {offsets = [16, 0], sizes = [16, 32], strides = [1, 1]} : vector<64x32xf32> to vector<16x32xf32>
    %52 = arith.addf %50, %51 : vector<16x32xf32>
    %53 = vector.extract_strided_slice %49 {offsets = [32, 0], sizes = [16, 32], strides = [1, 1]} : vector<64x32xf32> to vector<16x32xf32>
    %54 = arith.addf %52, %53 : vector<16x32xf32>
    %55 = vector.extract_strided_slice %49 {offsets = [48, 0], sizes = [16, 32], strides = [1, 1]} : vector<64x32xf32> to vector<16x32xf32>
    %56 = arith.addf %54, %55 : vector<16x32xf32>
    %c1 = arith.constant 1 : index
    %57 = memref.load %arg4[%c1] : memref<5xf32, #tpu.memory_space<smem>>
    %c2 = arith.constant 2 : index
    %58 = memref.load %arg4[%c2] : memref<5xf32, #tpu.memory_space<smem>>
    %c3 = arith.constant 3 : index
    %59 = memref.load %arg4[%c3] : memref<5xf32, #tpu.memory_space<smem>>
    %c4 = arith.constant 4 : index
    %60 = memref.load %arg4[%c4] : memref<5xf32, #tpu.memory_space<smem>>
    %61 = vector.shape_cast %56 : vector<16x32xf32> to vector<1x16x32xf32>
    %cst_17 = arith.constant dense<0.000000e+00> : vector<1xf32>
    %62 = vector.multi_reduction <add>, %61, %cst_17 [1, 2] : vector<1x16x32xf32> to vector<1xf32>
    %63 = vector.shape_cast %62 : vector<1xf32> to vector<1x1x1xf32>
    %64 = vector.extract %63[0, 0, 0] : f32 from vector<1x1x1xf32>
    %65 = vector.broadcast %64 : f32 to vector<1x1xf32>
    %66 = arith.mulf %56, %56 : vector<16x32xf32>
    %67 = vector.shape_cast %66 : vector<16x32xf32> to vector<1x16x32xf32>
    %cst_18 = arith.constant dense<0.000000e+00> : vector<1xf32>
    %68 = vector.multi_reduction <add>, %67, %cst_18 [1, 2] : vector<1x16x32xf32> to vector<1xf32>
    %69 = vector.shape_cast %68 : vector<1xf32> to vector<1x1x1xf32>
    %70 = vector.extract %69[0, 0, 0] : f32 from vector<1x1x1xf32>
    %71 = vector.broadcast %70 : f32 to vector<1x1xf32>
    %cst_19 = arith.constant 5.120000e+02 : f32
    %72 = vector.broadcast %cst_19 : f32 to vector<1x1xf32>
    %73 = arith.divf %65, %72 : vector<1x1xf32>
    %cst_20 = arith.constant 5.120000e+02 : f32
    %74 = vector.broadcast %cst_20 : f32 to vector<1x1xf32>
    %75 = arith.divf %71, %74 : vector<1x1xf32>
    %76 = arith.mulf %73, %73 : vector<1x1xf32>
    %77 = arith.subf %75, %76 : vector<1x1xf32>
    %cst_21 = arith.constant 0.000000e+00 : f32
    %78 = vector.broadcast %cst_21 : f32 to vector<1x1xf32>
    %79 = arith.maximumf %77, %78 : vector<1x1xf32>
    %80 = vector.broadcast %57 : f32 to vector<1x1xf32>
    %81 = arith.mulf %80, %73 : vector<1x1xf32>
    %82 = vector.broadcast %58 : f32 to vector<1x1xf32>
    %83 = arith.addf %81, %82 : vector<1x1xf32>
    %84 = arith.mulf %57, %57 : f32
    %85 = vector.broadcast %84 : f32 to vector<1x1xf32>
    %86 = arith.mulf %85, %79 : vector<1x1xf32>
    %cst_22 = arith.constant 9.99999974E-6 : f32
    %87 = vector.broadcast %cst_22 : f32 to vector<1x1xf32>
    %88 = arith.addf %86, %87 : vector<1x1xf32>
    %89 = math.rsqrt %88 : vector<1x1xf32>
    %90 = arith.mulf %59, %57 : f32
    %91 = vector.broadcast %90 : f32 to vector<1x1xf32>
    %92 = arith.mulf %91, %89 : vector<1x1xf32>
    %93 = vector.broadcast %58 : f32 to vector<1x1xf32>
    %94 = arith.subf %93, %83 : vector<1x1xf32>
    %95 = vector.broadcast %59 : f32 to vector<1x1xf32>
    %96 = arith.mulf %95, %94 : vector<1x1xf32>
    %97 = arith.mulf %96, %89 : vector<1x1xf32>
    %98 = vector.broadcast %60 : f32 to vector<1x1xf32>
    %99 = arith.addf %97, %98 : vector<1x1xf32>
    %100 = vector.broadcast %92 : vector<1x1xf32> to vector<16x32xf32>
    %101 = arith.mulf %100, %56 : vector<16x32xf32>
    %102 = vector.broadcast %99 : vector<1x1xf32> to vector<16x32xf32>
    %103 = arith.addf %101, %102 : vector<16x32xf32>
    %cst_23 = arith.constant 0.000000e+00 : f32
    %104 = vector.broadcast %cst_23 : f32 to vector<16x32xf32>
    %105 = arith.cmpf ogt, %103, %104 : vector<16x32xf32>
    %cst_24 = arith.constant 2.000000e-01 : f32
    %106 = vector.broadcast %cst_24 : f32 to vector<16x32xf32>
    %107 = arith.mulf %106, %103 : vector<16x32xf32>
    %108 = arith.select %105, %103, %107 : vector<16x32xi1>, vector<16x32xf32>
    %c0_25 = arith.constant 0 : index
    %c0_26 = arith.constant 0 : index
    %109 = vector.load %arg5[%c0_25, %c0_26] : memref<16x32xf32, #tpu.memory_space<vmem>>, vector<16x32xf32>
    tpu.vector_store %arg5[%c0_25, %c0_26], %108 {strides = array<i32>} : memref<16x32xf32, #tpu.memory_space<vmem>>, vector<16x32xf32>,
    return
  }
}

</mosaic_0001>

<llo_original>
// kernel: local_gcn_forward.1
$region0: #{local_gcn_forward.1}
  #allocation0 [shape = 'u32[]', space=smem, size = 0x4, offset = 0x4, fixed_abs, tag = 'smem constant byte address 0x4 - core index']
  #allocation1 [shape = 'u32[144,128]{1,0:T(1,128)}', space=vmem, size = 0x12000, scoped, tag = 'internal scratch']
  %s0 = inlined_call_operand.vmem [shape: f32[64,3], index: 0, kind: input, shape index: {}]
  %s1 = inlined_call_operand.vmem [shape: f32[64,3], index: 1, kind: input, shape index: {}]
  %s2 = inlined_call_operand.vmem [shape: f32[64,32], index: 2, kind: input, shape index: {}]
  %s3 = inlined_call_operand.vmem [shape: f32[23,10], index: 3, kind: input, shape index: {}]
  %s4 = inlined_call_operand.vmem [shape: f32[5], index: 4, kind: input, shape index: {}]
  %s5 = inlined_call_operand.hbm [shape: f32[16,32], index: 5, kind: output, shape index: {}]
  %s6 = sld [smem:[#allocation0]]
  $region34: #{local_gcn_forward.1} parent=0
    _
  %s8 = ssub.s32 1, %s6
  %s9 = scalar_select 0, %s8, %s6
  $region1: #{local_gcn_forward.1} parent=0
    #allocation2 [shape = 'u8[512]{0}', space=smem, size = 0x200, scoped, tag = 'input window, operand 4, single buffered']
    #allocation3 [shape = 's32[1]{0}', space=sflag, size = 0x4, scoped, tag = 'scoped memory for local_gcn_forward.1']
    #allocation4 [shape = 's32[1]{0}', space=sflag, size = 0x4, scoped, tag = 'scoped memory for local_gcn_forward.1']
    #allocation5 [shape = 'u8[8192]{0}', space=vmem, size = 0x2000, scoped, tag = 'output window, operand 0, single buffered']
    %10 = vsyncpa [#allocation4], 0
    %11 = vsyncpa [#allocation3], 0
    // Predicated region
    $region2: #{local_gcn_forward.1} parent=1 // pred_check
      _
    $region3: #{local_gcn_forward.1} parent=1 // pred_check_branch
      %13 = sbr.rel (0) target = $region5
    $region4: #{local_gcn_forward.1} parent=1 // pred_region
      _
    $region5: #{local_gcn_forward.1} parent=1 // pred_fallthru
      _
    // Predicated region
    $region6: #{local_gcn_forward.1} parent=1 // pred_check
      _
    $region7: #{local_gcn_forward.1} parent=1 // pred_check_branch
      %15 = sbr.rel (0) target = $region9
    $region8: #{local_gcn_forward.1} parent=1 // pred_region
      _
    $region9: #{local_gcn_forward.1} parent=1 // pred_fallthru
      _
    // Predicated region
    $region10: #{local_gcn_forward.1} parent=1 // pred_check
      _
    $region11: #{local_gcn_forward.1} parent=1 // pred_check_branch
      %17 = sbr.rel (0) target = $region13
    $region12: #{local_gcn_forward.1} parent=1 // pred_region
      _
    $region13: #{local_gcn_forward.1} parent=1 // pred_fallthru
      _
    // Predicated region
    $region14: #{local_gcn_forward.1} parent=1 // pred_check
      _
    $region15: #{local_gcn_forward.1} parent=1 // pred_check_branch
      %19 = sbr.rel (0) target = $region17
    $region16: #{local_gcn_forward.1} parent=1 // pred_region
      _
    $region17: #{local_gcn_forward.1} parent=1 // pred_fallthru
      _
    // Predicated region
    $region18: #{local_gcn_forward.1} parent=1 // pred_check
      _
    $region19: #{local_gcn_forward.1} parent=1 // pred_check_branch
      %21 = sbr.rel (0) target = $region21
    $region20: #{local_gcn_forward.1} parent=1 // pred_region
      %s23 = ssub.s32 16, 16
      %24 = vsyncadd [#allocation4], %s23
      %s26 = sshll.u32 %s4, 4
      %s27 = int_to_ptr.vmem [resolvable:$true] %s26
      %29 = dma.vmem_to_smem %s27, 16, [#allocation2], [#allocation4]
    $region21: #{local_gcn_forward.1} parent=1 // pred_fallthru
      _
    // Predicated region
    $region22: #{local_gcn_forward.1} parent=1 // pred_check
      _
    $region23: #{local_gcn_forward.1} parent=1 // pred_check_branch
      %31 = sbr.rel (0) target = $region25
    $region24: #{local_gcn_forward.1} parent=1 // pred_region
      %32 = dma.done [#allocation4], 16
    $region25: #{local_gcn_forward.1} parent=1 // pred_fallthru
      _
    %33 = sfence
    %v34 = vld [vmem:[%s0] sm:$0xff]
    %v35 = vld [vmem:[%s0 + $0x8] sm:$0xff]
    %v36 = vld [vmem:[%s0 + $0x10] sm:$0xff]
    %v37 = vld [vmem:[%s0 + $0x18] sm:$0xff]
    %v38 = vld [vmem:[%s0 + $0x20] sm:$0xff]
    %v39 = vld [vmem:[%s0 + $0x28] sm:$0xff]
    %v40 = vld [vmem:[%s0 + $0x30] sm:$0xff]
    %v41 = vld [vmem:[%s0 + $0x38] sm:$0xff]
    %v42 = vld [vmem:[%s1] sm:$0xff]
    %v43 = vld [vmem:[%s1 + $0x8] sm:$0xff]
    %v44 = vld [vmem:[%s1 + $0x10] sm:$0xff]
    %v45 = vld [vmem:[%s1 + $0x18] sm:$0xff]
    %v46 = vld [vmem:[%s1 + $0x20] sm:$0xff]
    %v47 = vld [vmem:[%s1 + $0x28] sm:$0xff]
    %v48 = vld [vmem:[%s1 + $0x30] sm:$0xff]
    %v49 = vld [vmem:[%s1 + $0x38] sm:$0xff]
    %v50 = vsub.f32 %v34, %v42
    %v51 = vsub.f32 %v35, %v43
    %v52 = vsub.f32 %v36, %v44
    %v53 = vsub.f32 %v37, %v45
    %v54 = vsub.f32 %v38, %v46
    %v55 = vsub.f32 %v39, %v47
    %v56 = vsub.f32 %v40, %v48
    %v57 = vsub.f32 %v41, %v49
    %v58 = vmul.f32 %v50, %v50
    %v59 = vmul.f32 %v51, %v51
    %v60 = vmul.f32 %v52, %v52
    %v61 = vmul.f32 %v53, %v53
    %v62 = vmul.f32 %v54, %v54
    %v63 = vmul.f32 %v55, %v55
    %v64 = vmul.f32 %v56, %v56
    %v65 = vmul.f32 %v57, %v57
    %vm66 = vcmask 23552
    %v67 = vsel %vm66, %v58, 0.0
    %68 = vadd.xlane.f32.xlu0 %v67
    %v69 = vpop.xlane.xlu0 %68
    %v70 = vsel %vm66, %v59, 0.0
    %71 = vadd.xlane.f32.xlu0 %v70
    %v72 = vpop.xlane.xlu0 %71
    %v73 = vsel %vm66, %v60, 0.0
    %74 = vadd.xlane.f32.xlu0 %v73
    %v75 = vpop.xlane.xlu0 %74
    %v76 = vsel %vm66, %v61, 0.0
    %77 = vadd.xlane.f32.xlu0 %v76
    %v78 = vpop.xlane.xlu0 %77
    %v79 = vsel %vm66, %v62, 0.0
    %80 = vadd.xlane.f32.xlu0 %v79
    %v81 = vpop.xlane.xlu0 %80
    %v82 = vsel %vm66, %v63, 0.0
    %83 = vadd.xlane.f32.xlu0 %v82
    %v84 = vpop.xlane.xlu0 %83
    %v85 = vsel %vm66, %v64, 0.0
    %86 = vadd.xlane.f32.xlu0 %v85
    %v87 = vpop.xlane.xlu0 %86
    %v88 = vsel %vm66, %v65, 0.0
    %89 = vadd.xlane.f32.xlu0 %v88
    %v90 = vpop.xlane.xlu0 %89
    %v91 = vrsqrt.pop %v69
    %v92 = vmul.f32 %v69, %v91
    %vm93 = vcmp.eq.f32.partialorder %v69, inf
    %v94 = vsel %vm93, %v69, %v92
    %vm95 = vcmp.eq.f32.partialorder %v69, 0.0
    %v96 = vand.u32 %v69, 2147483648
    %v97 = vsel %vm95, %v96, %v94
    %v98 = vrsqrt.pop %v72
    %v99 = vmul.f32 %v72, %v98
    %vm100 = vcmp.eq.f32.partialorder %v72, inf
    %v101 = vsel %vm100, %v72, %v99
    %vm102 = vcmp.eq.f32.partialorder %v72, 0.0
    %v103 = vand.u32 %v72, 2147483648
    %v104 = vsel %vm102, %v103, %v101
    %v105 = vrsqrt.pop %v75
    %v106 = vmul.f32 %v75, %v105
    %vm107 = vcmp.eq.f32.partialorder %v75, inf
    %v108 = vsel %vm107, %v75, %v106
    %vm109 = vcmp.eq.f32.partialorder %v75, 0.0
    %v110 = vand.u32 %v75, 2147483648
    %v111 = vsel %vm109, %v110, %v108
    %v112 = vrsqrt.pop %v78
    %v113 = vmul.f32 %v78, %v112
    %vm114 = vcmp.eq.f32.partialorder %v78, inf
    %v115 = vsel %vm114, %v78, %v113
    %vm116 = vcmp.eq.f32.partialorder %v78, 0.0
    %v117 = vand.u32 %v78, 2147483648
    %v118 = vsel %vm116, %v117, %v115
    %v119 = vrsqrt.pop %v81
    %v120 = vmul.f32 %v81, %v119
    %vm121 = vcmp.eq.f32.partialorder %v81, inf
    %v122 = vsel %vm121, %v81, %v120
    %vm123 = vcmp.eq.f32.partialorder %v81, 0.0
    %v124 = vand.u32 %v81, 2147483648
    %v125 = vsel %vm123, %v124, %v122
    %v126 = vrsqrt.pop %v84
    %v127 = vmul.f32 %v84, %v126
    %vm128 = vcmp.eq.f32.partialorder %v84, inf
    %v129 = vsel %vm128, %v84, %v127
    %vm130 = vcmp.eq.f32.partialorder %v84, 0.0
    %v131 = vand.u32 %v84, 2147483648
    %v132 = vsel %vm130, %v131, %v129
    %v133 = vrsqrt.pop %v87
    %v134 = vmul.f32 %v87, %v133
    %vm135 = vcmp.eq.f32.partialorder %v87, inf
    %v136 = vsel %vm135, %v87, %v134
    %vm137 = vcmp.eq.f32.partialorder %v87, 0.0
    %v138 = vand.u32 %v87, 2147483648
    %v139 = vsel %vm137, %v138, %v136
    %v140 = vrsqrt.pop %v90
    %v141 = vmul.f32 %v90, %v140
    %vm142 = vcmp.eq.f32.partialorder %v90, inf
    %v143 = vsel %vm142, %v90, %v141
    %vm144 = vcmp.eq.f32.partialorder %v90, 0.0
    %v145 = vand.u32 %v90, 2147483648
    %v146 = vsel %vm144, %v145, %v143
    %v147 = vld [vmem:[%s3] sm:$0xff]
    %v148 = vld [vmem:[%s3 + $0x8] sm:$0xff]
    %v149 = vld [vmem:[%s3 + $0x10] sm:$0x7f]
    %v151 = vrot.slane %v147, 3
    %v153 = vsel %vm66, %v42, 0
    %v156 = vsel %vm66, %v43, 0
    %v159 = vsel %vm66, %v44, 0
    %v162 = vsel %vm66, %v45, 0
    %v165 = vsel %vm66, %v46, 0
    %v168 = vsel %vm66, %v47, 0
    %v171 = vsel %vm66, %v48, 0
    %v174 = vsel %vm66, %v49, 0
    %vm176 = vcmask 1042432
    %v177 = vsel %vm176, %v151, 0
    %179 = vmatprep.subr.mxu0 0.0
    %180 = vmatpush1.msra.mxu0 %v177
    %181 = vmatprep.subr.mxu0 0.0
    %182 = vmatpush1.msra.mxu0 0.0
    %183 = vmatprep.subr.mxu0 0.0
    %184 = vmatpush1.msra.mxu0 0.0
    %185 = vmatprep.subr.mxu0 0.0
    %186 = vmatpush1.msra.mxu0 0.0
    %187 = vmatprep.subr.mxu0 0.0
    %188 = vmatpush1.msra.mxu0 0.0
    %189 = vmatprep.subr.mxu0 0.0
    %190 = vmatpush1.msra.mxu0 0.0
    %191 = vmatprep.subr.mxu0 0.0
    %192 = vmatpush1.msra.mxu0 0.0
    %193 = vmatprep.subr.mxu0 0.0
    %194 = vmatpush1.msra.mxu0 0.0
    %195 = vmatprep.subr.mxu0 0.0
    %196 = vmatpush1.msra.mxu0 0.0
    %197 = vmatprep.subr.mxu0 0.0
    %198 = vmatpush1.msra.mxu0 0.0
    %199 = vmatprep.subr.mxu0 0.0
    %200 = vmatpush1.msra.mxu0 0.0
    %201 = vmatprep.subr.mxu0 0.0
    %202 = vmatpush1.msra.mxu0 0.0
    %203 = vmatprep.subr.mxu0 0.0
    %204 = vmatpush1.msra.mxu0 0.0
    %205 = vmatprep.subr.mxu0 0.0
    %206 = vmatpush1.msra.mxu0 0.0
    %207 = vmatprep.subr.mxu0 0.0
    %208 = vmatpush1.msra.mxu0 0.0
    %209 = vmatprep.subr.mxu0 0.0
    %210 = vmatpush1.msra.mxu0 0.0
    %211 = vmatprep.subr.mxu0 0.0
    %212 = vmatpush1.msra.mxu0 0.0
    %213 = vmatprep.subr.mxu0 0.0
    %214 = vmatpush1.msra.mxu0 0.0
    %215 = vmatprep.subr.mxu0 0.0
    %216 = vmatpush1.msra.mxu0 0.0
    %217 = vmatprep.subr.mxu0 0.0
    %218 = vmatpush1.msra.mxu0 0.0
    %219 = vmatprep.subr.mxu0 0.0
    %220 = vmatpush1.msra.mxu0 0.0
    %221 = vmatprep.subr.mxu0 0.0
    %222 = vmatpush1.msra.mxu0 0.0
    %223 = vmatprep.subr.mxu0 0.0
    %224 = vmatpush1.msra.mxu0 0.0
    %225 = vmatprep.subr.mxu0 0.0
    %226 = vmatpush1.msra.mxu0 0.0
    %227 = vmatprep.subr.mxu0 0.0
    %228 = vmatpush1.msra.mxu0 0.0
    %229 = vmatprep.subr.mxu0 0.0
    %230 = vmatpush1.msra.mxu0 0.0
    %231 = vmatprep.subr.mxu0 0.0
    %232 = vmatpush1.msra.mxu0 0.0
    %233 = vmatprep.subr.mxu0 0.0
    %234 = vmatpush1.msra.mxu0 0.0
    %235 = vmatprep.subr.mxu0 0.0
    %236 = vmatpush1.msra.mxu0 0.0
    %237 = vmatprep.subr.mxu0 0.0
    %238 = vmatpush1.msra.mxu0 0.0
    %239 = vmatprep.subr.mxu0 0.0
    %240 = vmatpush1.msra.mxu0 0.0
    %241 = vmatprep.subr.mxu0 0.0
    %242 = vmatpush1.msra.mxu0 0.0
    %243 = vmatprep.mubr.f32.mxu0 0.0
    %244 = vmatmul.mubr.f32.gmra.mrb[0].mxu0 %v153
    %v245 = vpop.f32.mrb[0].mxu0
    %v246 = vadd.f32 0.0, %v245
    %v247 = vpop.f32.mrb[0].mxu0
    %248 = vmatprep.mubr.f32.mxu0 0.0
    %249 = vmatmul.mubr.f32.gmra.mrb[0].mxu0 %v156
    %v250 = vpop.f32.mrb[0].mxu0
    %v251 = vadd.f32 0.0, %v250
    %v252 = vpop.f32.mrb[0].mxu0
    %253 = vmatprep.mubr.f32.mxu0 0.0
    %254 = vmatmul.mubr.f32.gmra.mrb[0].mxu0 %v159
    %v255 = vpop.f32.mrb[0].mxu0
    %v256 = vadd.f32 0.0, %v255
    %v257 = vpop.f32.mrb[0].mxu0
    %258 = vmatprep.mubr.f32.mxu0 0.0
    %259 = vmatmul.mubr.f32.gmra.mrb[0].mxu0 %v162
    %v260 = vpop.f32.mrb[0].mxu0
    %v261 = vadd.f32 0.0, %v260
    %v262 = vpop.f32.mrb[0].mxu0
    %263 = vmatprep.mubr.f32.mxu0 0.0
    %264 = vmatmul.mubr.f32.gmra.mrb[0].mxu0 %v165
    %v265 = vpop.f32.mrb[0].mxu0
    %v266 = vadd.f32 0.0, %v265
    %v267 = vpop.f32.mrb[0].mxu0
    %268 = vmatprep.mubr.f32.mxu0 0.0
    %269 = vmatmul.mubr.f32.gmra.mrb[0].mxu0 %v168
    %v270 = vpop.f32.mrb[0].mxu0
    %v271 = vadd.f32 0.0, %v270
    %v272 = vpop.f32.mrb[0].mxu0
    %273 = vmatprep.mubr.f32.mxu0 0.0
    %274 = vmatmul.mubr.f32.gmra.mrb[0].mxu0 %v171
    %v275 = vpop.f32.mrb[0].mxu0
    %v276 = vadd.f32 0.0, %v275
    %v277 = vpop.f32.mrb[0].mxu0
    %278 = vmatprep.mubr.f32.mxu0 0.0
    %279 = vmatmul.mubr.f32.gmra.mrb[0].mxu0 %v174
    %v280 = vpop.f32.mrb[0].mxu0
    %v281 = vadd.f32 0.0, %v280
    %v282 = vpop.f32.mrb[0].mxu0
    %283 = vdwg.mxu0
    %v285 = vsel %vm66, %v34, 0
    %v288 = vsel %vm66, %v35, 0
    %v291 = vsel %vm66, %v36, 0
    %v294 = vsel %vm66, %v37, 0
    %v297 = vsel %vm66, %v38, 0
    %v300 = vsel %vm66, %v39, 0
    %v303 = vsel %vm66, %v40, 0
    %v306 = vsel %vm66, %v41, 0
    %v308 = vsel %vm176, %v147, 0
    %310 = vmatprep.subr.mxu0 0.0
    %311 = vmatpush1.msra.mxu0 %v308
    %312 = vmatprep.subr.mxu0 0.0
    %313 = vmatpush1.msra.mxu0 0.0
    %314 = vmatprep.subr.mxu0 0.0
    %315 = vmatpush1.msra.mxu0 0.0
    %316 = vmatprep.subr.mxu0 0.0
    %317 = vmatpush1.msra.mxu0 0.0
    %318 = vmatprep.subr.mxu0 0.0
    %319 = vmatpush1.msra.mxu0 0.0
    %320 = vmatprep.subr.mxu0 0.0
    %321 = vmatpush1.msra.mxu0 0.0
    %322 = vmatprep.subr.mxu0 0.0
    %323 = vmatpush1.msra.mxu0 0.0
    %324 = vmatprep.subr.mxu0 0.0
    %325 = vmatpush1.msra.mxu0 0.0
    %326 = vmatprep.subr.mxu0 0.0
    %327 = vmatpush1.msra.mxu0 0.0
    %328 = vmatprep.subr.mxu0 0.0
    %329 = vmatpush1.msra.mxu0 0.0
    %330 = vmatprep.subr.mxu0 0.0
    %331 = vmatpush1.msra.mxu0 0.0
    %332 = vmatprep.subr.mxu0 0.0
    %333 = vmatpush1.msra.mxu0 0.0
    %334 = vmatprep.subr.mxu0 0.0
    %335 = vmatpush1.msra.mxu0 0.0
    %336 = vmatprep.subr.mxu0 0.0
    %337 = vmatpush1.msra.mxu0 0.0
    %338 = vmatprep.subr.mxu0 0.0
    %339 = vmatpush1.msra.mxu0 0.0
    %340 = vmatprep.subr.mxu0 0.0
    %341 = vmatpush1.msra.mxu0 0.0
    %342 = vmatprep.subr.mxu0 0.0
    %343 = vmatpush1.msra.mxu0 0.0
    %344 = vmatprep.subr.mxu0 0.0
    %345 = vmatpush1.msra.mxu0 0.0
    %346 = vmatprep.subr.mxu0 0.0
    %347 = vmatpush1.msra.mxu0 0.0
    %348 = vmatprep.subr.mxu0 0.0
    %349 = vmatpush1.msra.mxu0 0.0
    %350 = vmatprep.subr.mxu0 0.0
    %351 = vmatpush1.msra.mxu0 0.0
    %352 = vmatprep.subr.mxu0 0.0
    %353 = vmatpush1.msra.mxu0 0.0
    %354 = vmatprep.subr.mxu0 0.0
    %355 = vmatpush1.msra.mxu0 0.0
    %356 = vmatprep.subr.mxu0 0.0
    %357 = vmatpush1.msra.mxu0 0.0
    %358 = vmatprep.subr.mxu0 0.0
    %359 = vmatpush1.msra.mxu0 0.0
    %360 = vmatprep.subr.mxu0 0.0
    %361 = vmatpush1.msra.mxu0 0.0
    %362 = vmatprep.subr.mxu0 0.0
    %363 = vmatpush1.msra.mxu0 0.0
    %364 = vmatprep.subr.mxu0 0.0
    %365 = vmatpush1.msra.mxu0 0.0
    %366 = vmatprep.subr.mxu0 0.0
    %367 = vmatpush1.msra.mxu0 0.0
    %368 = vmatprep.subr.mxu0 0.0
    %369 = vmatpush1.msra.mxu0 0.0
    %370 = vmatprep.subr.mxu0 0.0
    %371 = vmatpush1.msra.mxu0 0.0
    %372 = vmatprep.subr.mxu0 0.0
    %373 = vmatpush1.msra.mxu0 0.0
    %374 = vmatprep.mubr.f32.mxu0 0.0
    %375 = vmatmul.mubr.f32.gmra.mrb[0].mxu0 %v285
    %v376 = vpop.f32.mrb[0].mxu0
    %v377 = vadd.f32 %v246, %v376
    %v378 = vpop.f32.mrb[0].mxu0
    %379 = vmatprep.mubr.f32.mxu0 0.0
    %380 = vmatmul.mubr.f32.gmra.mrb[0].mxu0 %v288
    %v381 = vpop.f32.mrb[0].mxu0
    %v382 = vadd.f32 %v251, %v381
    %v383 = vpop.f32.mrb[0].mxu0
    %384 = vmatprep.mubr.f32.mxu0 0.0
    %385 = vmatmul.mubr.f32.gmra.mrb[0].mxu0 %v291
    %v386 = vpop.f32.mrb[0].mxu0
    %v387 = vadd.f32 %v256, %v386
    %v388 = vpop.f32.mrb[0].mxu0
    %389 = vmatprep.mubr.f32.mxu0 0.0
    %390 = vmatmul.mubr.f32.gmra.mrb[0].mxu0 %v294
    %v391 = vpop.f32.mrb[0].mxu0
    %v392 = vadd.f32 %v261, %v391
    %v393 = vpop.f32.mrb[0].mxu0
    %394 = vmatprep.mubr.f32.mxu0 0.0
    %395 = vmatmul.mubr.f32.gmra.mrb[0].mxu0 %v297
    %v396 = vpop.f32.mrb[0].mxu0
    %v397 = vadd.f32 %v266, %v396
    %v398 = vpop.f32.mrb[0].mxu0
    %399 = vmatprep.mubr.f32.mxu0 0.0
    %400 = vmatmul.mubr.f32.gmra.mrb[0].mxu0 %v300
    %v401 = vpop.f32.mrb[0].mxu0
    %v402 = vadd.f32 %v271, %v401
    %v403 = vpop.f32.mrb[0].mxu0
    %404 = vmatprep.mubr.f32.mxu0 0.0
    %405 = vmatmul.mubr.f32.gmra.mrb[0].mxu0 %v303
    %v406 = vpop.f32.mrb[0].mxu0
    %v407 = vadd.f32 %v276, %v406
    %v408 = vpop.f32.mrb[0].mxu0
    %409 = vmatprep.mubr.f32.mxu0 0.0
    %410 = vmatmul.mubr.f32.gmra.mrb[0].mxu0 %v306
    %v411 = vpop.f32.mrb[0].mxu0
    %v412 = vadd.f32 %v281, %v411
    %v413 = vpop.f32.mrb[0].mxu0
    %414 = vdwg.mxu0
    %vm416 = vcmask 1041408
    %v417 = vrot.slane %v147, 6
    %v418 = vrot.slane %v148, 6
    %v419 = vsel %vm416, %v417, %v418
    %v421 = vsel %vm66, %v50, 0
    %v424 = vsel %vm66, %v51, 0
    %v427 = vsel %vm66, %v52, 0
    %v430 = vsel %vm66, %v53, 0
    %v433 = vsel %vm66, %v54, 0
    %v436 = vsel %vm66, %v55, 0
    %v439 = vsel %vm66, %v56, 0
    %v442 = vsel %vm66, %v57, 0
    %v444 = vsel %vm176, %v419, 0
    %446 = vmatprep.subr.mxu0 0.0
    %447 = vmatpush1.msra.mxu0 %v444
    %448 = vmatprep.subr.mxu0 0.0
    %449 = vmatpush1.msra.mxu0 0.0
    %450 = vmatprep.subr.mxu0 0.0
    %451 = vmatpush1.msra.mxu0 0.0
    %452 = vmatprep.subr.mxu0 0.0
    %453 = vmatpush1.msra.mxu0 0.0
    %454 = vmatprep.subr.mxu0 0.0
    %455 = vmatpush1.msra.mxu0 0.0
    %456 = vmatprep.subr.mxu0 0.0
    %457 = vmatpush1.msra.mxu0 0.0
    %458 = vmatprep.subr.mxu0 0.0
    %459 = vmatpush1.msra.mxu0 0.0
    %460 = vmatprep.subr.mxu0 0.0
    %461 = vmatpush1.msra.mxu0 0.0
    %462 = vmatprep.subr.mxu0 0.0
    %463 = vmatpush1.msra.mxu0 0.0
    %464 = vmatprep.subr.mxu0 0.0
    %465 = vmatpush1.msra.mxu0 0.0
    %466 = vmatprep.subr.mxu0 0.0
    %467 = vmatpush1.msra.mxu0 0.0
    %468 = vmatprep.subr.mxu0 0.0
    %469 = vmatpush1.msra.mxu0 0.0
    %470 = vmatprep.subr.mxu0 0.0
    %471 = vmatpush1.msra.mxu0 0.0
    %472 = vmatprep.subr.mxu0 0.0
    %473 = vmatpush1.msra.mxu0 0.0
    %474 = vmatprep.subr.mxu0 0.0
    %475 = vmatpush1.msra.mxu0 0.0
    %476 = vmatprep.subr.mxu0 0.0
    %477 = vmatpush1.msra.mxu0 0.0
    %478 = vmatprep.subr.mxu0 0.0
    %479 = vmatpush1.msra.mxu0 0.0
    %480 = vmatprep.subr.mxu0 0.0
    %481 = vmatpush1.msra.mxu0 0.0
    %482 = vmatprep.subr.mxu0 0.0
    %483 = vmatpush1.msra.mxu0 0.0
    %484 = vmatprep.subr.mxu0 0.0
    %485 = vmatpush1.msra.mxu0 0.0
    %486 = vmatprep.subr.mxu0 0.0
    %487 = vmatpush1.msra.mxu0 0.0
    %488 = vmatprep.subr.mxu0 0.0
    %489 = vmatpush1.msra.mxu0 0.0
    %490 = vmatprep.subr.mxu0 0.0
    %491 = vmatpush1.msra.mxu0 0.0
    %492 = vmatprep.subr.mxu0 0.0
    %493 = vmatpush1.msra.mxu0 0.0
    %494 = vmatprep.subr.mxu0 0.0
    %495 = vmatpush1.msra.mxu0 0.0
    %496 = vmatprep.subr.mxu0 0.0
    %497 = vmatpush1.msra.mxu0 0.0
    %498 = vmatprep.subr.mxu0 0.0
    %499 = vmatpush1.msra.mxu0 0.0
    %500 = vmatprep.subr.mxu0 0.0
    %501 = vmatpush1.msra.mxu0 0.0
    %502 = vmatprep.subr.mxu0 0.0
    %503 = vmatpush1.msra.mxu0 0.0
    %504 = vmatprep.subr.mxu0 0.0
    %505 = vmatpush1.msra.mxu0 0.0
    %506 = vmatprep.subr.mxu0 0.0
    %507 = vmatpush1.msra.mxu0 0.0
    %508 = vmatprep.subr.mxu0 0.0
    %509 = vmatpush1.msra.mxu0 0.0
    %510 = vmatprep.mubr.f32.mxu0 0.0
    %511 = vmatmul.mubr.f32.gmra.mrb[0].mxu0 %v421
    %v512 = vpop.f32.mrb[0].mxu0
    %v513 = vadd.f32 0.0, %v512
    %v514 = vpop.f32.mrb[0].mxu0
    %515 = vmatprep.mubr.f32.mxu0 0.0
    %516 = vmatmul.mubr.f32.gmra.mrb[0].mxu0 %v424
    %v517 = vpop.f32.mrb[0].mxu0
    %v518 = vadd.f32 0.0, %v517
    %v519 = vpop.f32.mrb[0].mxu0
    %520 = vmatprep.mubr.f32.mxu0 0.0
    %521 = vmatmul.mubr.f32.gmra.mrb[0].mxu0 %v427
    %v522 = vpop.f32.mrb[0].mxu0
    %v523 = vadd.f32 0.0, %v522
    %v524 = vpop.f32.mrb[0].mxu0
    %525 = vmatprep.mubr.f32.mxu0 0.0
    %526 = vmatmul.mubr.f32.gmra.mrb[0].mxu0 %v430
    %v527 = vpop.f32.mrb[0].mxu0
    %v528 = vadd.f32 0.0, %v527
    %v529 = vpop.f32.mrb[0].mxu0
    %530 = vmatprep.mubr.f32.mxu0 0.0
    %531 = vmatmul.mubr.f32.gmra.mrb[0].mxu0 %v433
    %v532 = vpop.f32.mrb[0].mxu0
    %v533 = vadd.f32 0.0, %v532
    %v534 = vpop.f32.mrb[0].mxu0
    %535 = vmatprep.mubr.f32.mxu0 0.0
    %536 = vmatmul.mubr.f32.gmra.mrb[0].mxu0 %v436
    %v537 = vpop.f32.mrb[0].mxu0
    %v538 = vadd.f32 0.0, %v537
    %v539 = vpop.f32.mrb[0].mxu0
    %540 = vmatprep.mubr.f32.mxu0 0.0
    %541 = vmatmul.mubr.f32.gmra.mrb[0].mxu0 %v439
    %v542 = vpop.f32.mrb[0].mxu0
    %v543 = vadd.f32 0.0, %v542
    %v544 = vpop.f32.mrb[0].mxu0
    %545 = vmatprep.mubr.f32.mxu0 0.0
    %546 = vmatmul.mubr.f32.gmra.mrb[0].mxu0 %v442
    %v547 = vpop.f32.mrb[0].mxu0
    %v548 = vadd.f32 0.0, %v547
    %v549 = vpop.f32.mrb[0].mxu0
    %550 = vdwg.mxu0
    %v551 = vadd.f32 %v377, %v513
    %v552 = vadd.f32 %v382, %v518
    %v553 = vadd.f32 %v387, %v523
    %v554 = vadd.f32 %v392, %v528
    %v555 = vadd.f32 %v397, %v533
    %v556 = vadd.f32 %v402, %v538
    %v557 = vadd.f32 %v407, %v543
    %v558 = vadd.f32 %v412, %v548
    %v559 = vlaneseq
    %v560 = vshrl.u32 %v559, 7
    %v561 = vsub.s32 1, %v560
    %v562 = vrot.slane %v148, %v561
    %v563 = vmul.f32 %v97, %v562
    %v564 = vmul.f32 %v104, %v562
    %v565 = vmul.f32 %v111, %v562
    %v566 = vmul.f32 %v118, %v562
    %v567 = vmul.f32 %v125, %v562
    %v568 = vmul.f32 %v132, %v562
    %v569 = vmul.f32 %v139, %v562
    %v570 = vmul.f32 %v146, %v562
    %v571 = vadd.f32 %v551, %v563
    %v572 = vadd.f32 %v552, %v564
    %v573 = vadd.f32 %v553, %v565
    %v574 = vadd.f32 %v554, %v566
    %v575 = vadd.f32 %v555, %v567
    %v576 = vadd.f32 %v556, %v568
    %v577 = vadd.f32 %v557, %v569
    %v578 = vadd.f32 %v558, %v570
    %v579 = vlaneseq
    %v580 = vshrl.u32 %v579, 7
    %v581 = vsub.s32 4, %v580
    %v582 = vrot.slane %v149, %v581
    %v583 = vadd.f32 %v571, %v582
    %v584 = vadd.f32 %v572, %v582
    %v585 = vadd.f32 %v573, %v582
    %v586 = vadd.f32 %v574, %v582
    %v587 = vadd.f32 %v575, %v582
    %v588 = vadd.f32 %v576, %v582
    %v589 = vadd.f32 %v577, %v582
    %v590 = vadd.f32 %v578, %v582
    %vm591 = vcmp.gt.f32.partialorder %v583, 0.0
    %vm592 = vcmp.gt.f32.partialorder %v584, 0.0
    %vm593 = vcmp.gt.f32.partialorder %v585, 0.0
    %vm594 = vcmp.gt.f32.partialorder %v586, 0.0
    %vm595 = vcmp.gt.f32.partialorder %v587, 0.0
    %vm596 = vcmp.gt.f32.partialorder %v588, 0.0
    %vm597 = vcmp.gt.f32.partialorder %v589, 0.0
    %vm598 = vcmp.gt.f32.partialorder %v590, 0.0
    %v599 = vmul.f32 %v583, 0.2
    %v600 = vmul.f32 %v584, 0.2
    %v601 = vmul.f32 %v585, 0.2
    %v602 = vmul.f32 %v586, 0.2
    %v603 = vmul.f32 %v587, 0.2
    %v604 = vmul.f32 %v588, 0.2
    %v605 = vmul.f32 %v589, 0.2
    %v606 = vmul.f32 %v590, 0.2
    %v607 = vsel %vm591, %v583, %v599
    %v608 = vsel %vm592, %v584, %v600
    %v609 = vsel %vm593, %v585, %v601
    %v610 = vsel %vm594, %v586, %v602
    %v611 = vsel %vm595, %v587, %v603
    %v612 = vsel %vm596, %v588, %v604
    %v613 = vsel %vm597, %v589, %v605
    %v614 = vsel %vm598, %v590, %v606
    %v615 = vlaneseq
    %v616 = vshrl.u32 %v615, 7
    %v617 = vsub.s32 5, %v616
    %v618 = vrot.slane %v149, %v617
    %vm620 = vcmask 1045504
    %v621 = vrot.slane %v148, 2
    %v622 = vrot.slane %v149, 2
    %v623 = vsel %vm620, %v621, %v622
    %vm625 = vcmask 80896
    %v627 = vsel %vm625, %v607, 0
    %v630 = vsel %vm625, %v608, 0
    %v633 = vsel %vm625, %v609, 0
    %v636 = vsel %vm625, %v610, 0
    %v639 = vsel %vm625, %v611, 0
    %v642 = vsel %vm625, %v612, 0
    %v645 = vsel %vm625, %v613, 0
    %v648 = vsel %vm625, %v614, 0
    %v650 = vsel %vm416, %v622, 0
    %652 = vmatprep.subr.mxu0 0.0
    %653 = vmatpush1.msra.mxu0 %v623
    %654 = vmatprep.subr.mxu0 0.0
    %655 = vmatpush1.msra.mxu0 %v650
    %656 = vmatprep.subr.mxu0 0.0
    %657 = vmatpush1.msra.mxu0 0.0
    %658 = vmatprep.subr.mxu0 0.0
    %659 = vmatpush1.msra.mxu0 0.0
    %660 = vmatprep.subr.mxu0 0.0
    %661 = vmatpush1.msra.mxu0 0.0
    %662 = vmatprep.subr.mxu0 0.0
    %663 = vmatpush1.msra.mxu0 0.0
    %664 = vmatprep.subr.mxu0 0.0
    %665 = vmatpush1.msra.mxu0 0.0
    %666 = vmatprep.subr.mxu0 0.0
    %667 = vmatpush1.msra.mxu0 0.0
    %668 = vmatprep.subr.mxu0 0.0
    %669 = vmatpush1.msra.mxu0 0.0
    %670 = vmatprep.subr.mxu0 0.0
    %671 = vmatpush1.msra.mxu0 0.0
    %672 = vmatprep.subr.mxu0 0.0
    %673 = vmatpush1.msra.mxu0 0.0
    %674 = vmatprep.subr.mxu0 0.0
    %675 = vmatpush1.msra.mxu0 0.0
    %676 = vmatprep.subr.mxu0 0.0
    %677 = vmatpush1.msra.mxu0 0.0
    %678 = vmatprep.subr.mxu0 0.0
    %679 = vmatpush1.msra.mxu0 0.0
    %680 = vmatprep.subr.mxu0 0.0
    %681 = vmatpush1.msra.mxu0 0.0
    %682 = vmatprep.subr.mxu0 0.0
    %683 = vmatpush1.msra.mxu0 0.0
    %684 = vmatprep.subr.mxu0 0.0
    %685 = vmatpush1.msra.mxu0 0.0
    %686 = vmatprep.subr.mxu0 0.0
    %687 = vmatpush1.msra.mxu0 0.0
    %688 = vmatprep.subr.mxu0 0.0
    %689 = vmatpush1.msra.mxu0 0.0
    %690 = vmatprep.subr.mxu0 0.0
    %691 = vmatpush1.msra.mxu0 0.0
    %692 = vmatprep.subr.mxu0 0.0
    %693 = vmatpush1.msra.mxu0 0.0
    %694 = vmatprep.subr.mxu0 0.0
    %695 = vmatpush1.msra.mxu0 0.0
    %696 = vmatprep.subr.mxu0 0.0
    %697 = vmatpush1.msra.mxu0 0.0
    %698 = vmatprep.subr.mxu0 0.0
    %699 = vmatpush1.msra.mxu0 0.0
    %700 = vmatprep.subr.mxu0 0.0
    %701 = vmatpush1.msra.mxu0 0.0
    %702 = vmatprep.subr.mxu0 0.0
    %703 = vmatpush1.msra.mxu0 0.0
    %704 = vmatprep.subr.mxu0 0.0
    %705 = vmatpush1.msra.mxu0 0.0
    %706 = vmatprep.subr.mxu0 0.0
    %707 = vmatpush1.msra.mxu0 0.0
    %708 = vmatprep.subr.mxu0 0.0
    %709 = vmatpush1.msra.mxu0 0.0
    %710 = vmatprep.subr.mxu0 0.0
    %711 = vmatpush1.msra.mxu0 0.0
    %712 = vmatprep.subr.mxu0 0.0
    %713 = vmatpush1.msra.mxu0 0.0
    %714 = vmatprep.subr.mxu0 0.0
    %715 = vmatpush1.msra.mxu0 0.0
    %716 = vmatprep.mubr.f32.mxu0 0.0
    %717 = vmatmul.mubr.f32.gmra.mrb[0].mxu0 %v627
    %v718 = vpop.f32.mrb[0].mxu0
    %v719 = vadd.f32 %v618, %v718
    %v720 = vpop.f32.mrb[0].mxu0
    %721 = vmatprep.mubr.f32.mxu0 0.0
    %722 = vmatmul.mubr.f32.gmra.mrb[0].mxu0 %v630
    %v723 = vpop.f32.mrb[0].mxu0
    %v724 = vadd.f32 %v618, %v723
    %v725 = vpop.f32.mrb[0].mxu0
    %726 = vmatprep.mubr.f32.mxu0 0.0
    %727 = vmatmul.mubr.f32.gmra.mrb[0].mxu0 %v633
    %v728 = vpop.f32.mrb[0].mxu0
    %v729 = vadd.f32 %v618, %v728
    %v730 = vpop.f32.mrb[0].mxu0
    %731 = vmatprep.mubr.f32.mxu0 0.0
    %732 = vmatmul.mubr.f32.gmra.mrb[0].mxu0 %v636
    %v733 = vpop.f32.mrb[0].mxu0
    %v734 = vadd.f32 %v618, %v733
    %v735 = vpop.f32.mrb[0].mxu0
    %736 = vmatprep.mubr.f32.mxu0 0.0
    %737 = vmatmul.mubr.f32.gmra.mrb[0].mxu0 %v639
    %v738 = vpop.f32.mrb[0].mxu0
    %v739 = vadd.f32 %v618, %v738
    %v740 = vpop.f32.mrb[0].mxu0
    %741 = vmatprep.mubr.f32.mxu0 0.0
    %742 = vmatmul.mubr.f32.gmra.mrb[0].mxu0 %v642
    %v743 = vpop.f32.mrb[0].mxu0
    %v744 = vadd.f32 %v618, %v743
    %v745 = vpop.f32.mrb[0].mxu0
    %746 = vmatprep.mubr.f32.mxu0 0.0
    %747 = vmatmul.mubr.f32.gmra.mrb[0].mxu0 %v645
    %v748 = vpop.f32.mrb[0].mxu0
    %v749 = vadd.f32 %v618, %v748
    %v750 = vpop.f32.mrb[0].mxu0
    %751 = vmatprep.mubr.f32.mxu0 0.0
    %752 = vmatmul.mubr.f32.gmra.mrb[0].mxu0 %v648
    %v753 = vpop.f32.mrb[0].mxu0
    %v754 = vadd.f32 %v618, %v753
    %v755 = vpop.f32.mrb[0].mxu0
    %756 = vdwg.mxu0
    %vm757 = vcmp.gt.f32.partialorder %v719, 0.0
    %vm758 = vcmp.gt.f32.partialorder %v724, 0.0
    %vm759 = vcmp.gt.f32.partialorder %v729, 0.0
    %vm760 = vcmp.gt.f32.partialorder %v734, 0.0
    %vm761 = vcmp.gt.f32.partialorder %v739, 0.0
    %vm762 = vcmp.gt.f32.partialorder %v744, 0.0
    %vm763 = vcmp.gt.f32.partialorder %v749, 0.0
    %vm764 = vcmp.gt.f32.partialorder %v754, 0.0
    %v765 = vmul.f32 %v719, 0.2
    %v766 = vmul.f32 %v724, 0.2
    %v767 = vmul.f32 %v729, 0.2
    %v768 = vmul.f32 %v734, 0.2
    %v769 = vmul.f32 %v739, 0.2
    %v770 = vmul.f32 %v744, 0.2
    %v771 = vmul.f32 %v749, 0.2
    %v772 = vmul.f32 %v754, 0.2
    %v773 = vsel %vm757, %v719, %v765
    %v774 = vsel %vm758, %v724, %v766
    %v775 = vsel %vm759, %v729, %v767
    %v776 = vsel %vm760, %v734, %v768
    %v777 = vsel %vm761, %v739, %v769
    %v778 = vsel %vm762, %v744, %v770
    %v779 = vsel %vm763, %v749, %v771
    %v780 = vsel %vm764, %v754, %v772
    %v781 = vlaneseq
    %v782 = vshrl.u32 %v781, 7
    %v783 = vsub.s32 6, %v782
    %v784 = vrot.slane %v149, %v783
    %v785 = vmul.f32 %v773, %v784
    %v786 = vmul.f32 %v774, %v784
    %v787 = vmul.f32 %v775, %v784
    %v788 = vmul.f32 %v776, %v784
    %v789 = vmul.f32 %v777, %v784
    %v790 = vmul.f32 %v778, %v784
    %v791 = vmul.f32 %v779, %v784
    %v792 = vmul.f32 %v780, %v784
    %v793 = vsel %vm625, %v785, 0.0
    %794 = vadd.xlane.f32.xlu0 %v793
    %v795 = vpop.xlane.xlu0 %794
    %v796 = vsel %vm625, %v786, 0.0
    %797 = vadd.xlane.f32.xlu0 %v796
    %v798 = vpop.xlane.xlu0 %797
    %v799 = vsel %vm625, %v787, 0.0
    %800 = vadd.xlane.f32.xlu0 %v799
    %v801 = vpop.xlane.xlu0 %800
    %v802 = vsel %vm625, %v788, 0.0
    %803 = vadd.xlane.f32.xlu0 %v802
    %v804 = vpop.xlane.xlu0 %803
    %v805 = vsel %vm625, %v789, 0.0
    %806 = vadd.xlane.f32.xlu0 %v805
    %v807 = vpop.xlane.xlu0 %806
    %v808 = vsel %vm625, %v790, 0.0
    %809 = vadd.xlane.f32.xlu0 %v808
    %v810 = vpop.xlane.xlu0 %809
    %v811 = vsel %vm625, %v791, 0.0
    %812 = vadd.xlane.f32.xlu0 %v811
    %v813 = vpop.xlane.xlu0 %812
    %v814 = vsel %vm625, %v792, 0.0
    %815 = vadd.xlane.f32.xlu0 %v814
    %v816 = vpop.xlane.xlu0 %815
    %s817 = sld [smem:[#allocation2]]
    %v818 = vstv %s817
    %v819 = vadd.f32 %v795, %v818
    %v820 = vadd.f32 %v798, %v818
    %v821 = vadd.f32 %v801, %v818
    %v822 = vadd.f32 %v804, %v818
    %v823 = vadd.f32 %v807, %v818
    %v824 = vadd.f32 %v810, %v818
    %v825 = vadd.f32 %v813, %v818
    %v826 = vadd.f32 %v816, %v818
    %v827 = vld [vmem:[%s2] sm:$0xff]
    %v828 = vld [vmem:[%s2 + $0x8] sm:$0xff]
    %v829 = vld [vmem:[%s2 + $0x10] sm:$0xff]
    %v830 = vld [vmem:[%s2 + $0x18] sm:$0xff]
    %v831 = vld [vmem:[%s2 + $0x20] sm:$0xff]
    %v832 = vld [vmem:[%s2 + $0x28] sm:$0xff]
    %v833 = vld [vmem:[%s2 + $0x30] sm:$0xff]
    %v834 = vld [vmem:[%s2 + $0x38] sm:$0xff]
    %v835 = vmul.f32 %v819, %v827
    %v836 = vmul.f32 %v820, %v828
    %v837 = vmul.f32 %v821, %v829
    %v838 = vmul.f32 %v822, %v830
    %v839 = vmul.f32 %v823, %v831
    %v840 = vmul.f32 %v824, %v832
    %v841 = vmul.f32 %v825, %v833
    %v842 = vmul.f32 %v826, %v834
    %v843 = vadd.f32 %v835, %v837
    %v844 = vadd.f32 %v836, %v838
    %v845 = vadd.f32 %v843, %v839
    %v846 = vadd.f32 %v844, %v840
    %v847 = vadd.f32 %v845, %v841
    %v848 = vadd.f32 %v846, %v842
    %s849 = sld [smem:[#allocation2 + $0x1]]
    %s850 = sld [smem:[#allocation2 + $0x2]]
    %s851 = sld [smem:[#allocation2 + $0x3]]
    %s852 = sld [smem:[#allocation2 + $0x4]]
    %vm853 = vcmask 261120
    %v854 = vsel %vm853, %v847, 0.0
    %v855 = vsel %vm853, %v848, 0.0
    %v856 = vadd.f32 %v854, %v855
    %857 = vadd.xlane.f32.xlu0 %v856
    %v858 = vpop.xlane.xlu0 %857
    %v859 = vrot.slane %v858, 4
    %v860 = vadd.f32 %v858, %v859
    %v861 = vrot.slane %v860, 2
    %v862 = vadd.f32 %v860, %v861
    %v863 = vrot.slane %v862, 1
    %v864 = vadd.f32 %v862, %v863
    %s865 = vtos %v864
    %v866 = vstv %s865
    %v867 = vmul.f32 %v847, %v847
    %v868 = vmul.f32 %v848, %v848
    %v869 = vsel %vm853, %v867, 0.0
    %v870 = vsel %vm853, %v868, 0.0
    %v871 = vadd.f32 %v869, %v870
    %872 = vadd.xlane.f32.xlu0 %v871
    %v873 = vpop.xlane.xlu0 %872
    %v874 = vrot.slane %v873, 4
    %v875 = vadd.f32 %v873, %v874
    %v876 = vrot.slane %v875, 2
    %v877 = vadd.f32 %v875, %v876
    %v878 = vrot.slane %v877, 1
    %v879 = vadd.f32 %v877, %v878
    %s880 = vtos %v879
    %v881 = vstv %s880
    %v882 = vrcp.pop 512.0
    %v883 = vmul.f32 %v866, %v882
    %v884 = vmul.f32 %v881, %v882
    %v885 = vmul.f32 %v883, %v883
    %v886 = vsub.f32 %v884, %v885
    %v887 = vmax.f32 %v886, 0.0
    %v888 = vstv %s849
    %v889 = vmul.f32 %v888, %v883
    %v890 = vstv %s850
    %v891 = vadd.f32 %v889, %v890
    %s892 = smul.f32 %s849, %s849
    %v893 = vstv %s892
    %v894 = vmul.f32 %v893, %v887
    %v895 = vadd.f32 %v894, 1e-05
    %v896 = vrsqrt.pop %v895
    %s897 = smul.f32 %s851, %s849
    %v898 = vstv %s897
    %v899 = vmul.f32 %v898, %v896
    %v900 = vsub.f32 %v890, %v891
    %v901 = vstv %s851
    %v902 = vmul.f32 %v901, %v900
    %v903 = vmul.f32 %v902, %v896
    %v904 = vstv %s852
    %v905 = vadd.f32 %v903, %v904
    %v906 = vmul.f32 %v899, %v847
    %v907 = vmul.f32 %v899, %v848
    %v908 = vadd.f32 %v906, %v905
    %v909 = vadd.f32 %v907, %v905
    %vm910 = vcmp.gt.f32.partialorder %v908, 0.0
    %vm911 = vcmp.gt.f32.partialorder %v909, 0.0
    %v912 = vmul.f32 %v908, 0.2
    %v913 = vmul.f32 %v909, 0.2
    %v914 = vsel %vm910, %v908, %v912
    %v915 = vsel %vm911, %v909, %v913
    %916 = vst.msk [vmem:[#allocation5] sm:$0xff] %vm853, %v914
    %917 = vst.msk [vmem:[#allocation5 + $0x8] sm:$0xff] %vm853, %v915
    // Predicated region
    $region26: #{local_gcn_forward.1} parent=1 // pred_check
      _
    $region27: #{local_gcn_forward.1} parent=1 // pred_check_branch
      %919 = sbr.rel (0) target = $region29
    $region28: #{local_gcn_forward.1} parent=1 // pred_region
      %s921 = ssub.s32 256, 256
      %922 = vsyncadd [#allocation3], %s921
      %s923 = sshll.u32 [#allocation5], 4
      %s924 = int_to_ptr.vmem [resolvable:$true] %s923
      %929 = dma.vmem_to_hbm [thread:$0]  %s924, 256, %s5, [#allocation3], 128, 128, 8
    $region29: #{local_gcn_forward.1} parent=1 // pred_fallthru
      _
    // Predicated region
    $region30: #{local_gcn_forward.1} parent=1 // pred_check
      _
    $region31: #{local_gcn_forward.1} parent=1 // pred_check_branch
      %931 = sbr.rel (0) target = $region33
    $region32: #{local_gcn_forward.1} parent=1 // pred_region
      %932 = dma.done [#allocation3], 256
    $region33: #{local_gcn_forward.1} parent=1 // pred_fallthru
      _
    %933 = vsyncpa [#allocation3], 1
    %934 = vsyncpa [#allocation4], 1

</llo_original>
